<compile_context>
chip_gen: v7x
topology: tpu7x:2x2x1
jax: 0.10.0
libtpu: 0.0.40
codegen_flags: <defaults>
</compile_context>

<pallas_src>
import functools

import jax
import jax.numpy as jnp
from jax.experimental import pallas as pl
from jax.experimental.pallas import tpu as pltpu

INPUT_DIM = 768
HIDDEN = 256
NUM_CLASSES = 3
OUT_PAD = 128          # lane-dense padded output width (>= NUM_CLASSES)


def _vmem_capacity_bytes(default=64 << 20):
    """Physical VMEM per TensorCore; conservative 64 MiB (v7x-safe) fallback."""
    try:
        info = pltpu.get_tpu_info()
        for name in ("vmem_capacity_bytes", "vmem_bytes", "vmem_size_bytes"):
            v = getattr(info, name, None)
            if v:
                return int(v)
    except Exception:
        pass
    return default


def _head_kernel(h_ref, w1_ref, b1_ref, w2_ref, b2_ref, o_ref, acc_ref, *,
                 seq_len, seq_tile, needs_mask):
    """One (batch_tile, seq_tile) grid step.

    h_ref : (TB, TS, H)      native dtype (f32)  VMEM (streamed)
    w1_ref: (H, 256)         f32                 VMEM (resident)
    b1_ref: (1, 256)         f32                 VMEM (resident)
    w2_ref: (256, OUT_PAD)   f32                 VMEM (resident, zero-padded past NUM_CLASSES)
    b2_ref: (1, OUT_PAD)     f32                 VMEM (resident, zero-padded)
    o_ref : (TB, OUT_PAD)    f32                 VMEM (written only on the last seq tile)
    acc_ref:(TB, H)          f32                 VMEM scratch (seq-sum accumulator)
    """
    s = pl.program_id(1)
    last = pl.num_programs(1) - 1

    @pl.when(s == 0)
    def _():
        acc_ref[...] = jnp.zeros_like(acc_ref)

    def _accumulate(mask_tail):
        h = h_ref[...].astype(jnp.float32)                    # no-op for f32 input
        if mask_tail:
            # Only the last (partial) tile needs masking; small (1, TS, 1) iota broadcast.
            pos = s * seq_tile + jax.lax.broadcasted_iota(jnp.int32, (1, seq_tile, 1), 1)
            h = jnp.where(pos < seq_len, h, 0.0)
        acc_ref[...] += jnp.sum(h, axis=1)                    # (TB, H), f32 accumulation

    if needs_mask:
        @pl.when(s != last)
        def _():
            _accumulate(False)

        @pl.when(s == last)
        def _():
            _accumulate(True)
    else:
        _accumulate(False)

    @pl.when(s == last)
    def _():
        pooled = acc_ref[...] * (1.0 / seq_len)               # mean over the TRUE seq length
        z1 = jnp.dot(pooled, w1_ref[...], preferred_element_type=jnp.float32)
        a1 = jnp.maximum(z1 + b1_ref[...], 0.0)               # fc1 + relu
        z2 = jnp.dot(a1, w2_ref[...], preferred_element_type=jnp.float32)
        o_ref[...] = jax.nn.sigmoid(z2 + b2_ref[...])         # fc2 + sigmoid (lane-dense store)


def custom_model_head(hidden_states, w1, b1, w2, b2):
    """hidden_states: (B, S, H) -> (B, NUM_CLASSES) float32."""
    B, S, H = hidden_states.shape
    C = w2.shape[1]
    itemsize = jnp.dtype(hidden_states.dtype).itemsize

    # Weights stay f32; fc2 padded to 128 output lanes (zeros), real C sliced outside.
    w1f = w1.astype(jnp.float32)
    b1r = b1.reshape(1, -1).astype(jnp.float32)
    w2p = jnp.zeros((w1.shape[1], OUT_PAD), jnp.float32).at[:, :C].set(w2.astype(jnp.float32))
    b2p = jnp.zeros((1, OUT_PAD), jnp.float32).at[:, :C].set(b2.astype(jnp.float32))

    vmem_cap = _vmem_capacity_bytes()

    # Tile selection (block last-two-dims must be multiples of (8, 128) or the full dim).
    TB = B if B <= 8 else 8
    if S <= 8:
        TS = S
    else:
        # f32 streaming: TS=512 -> 12 MiB/buf (fits v7x's 64 MiB double-buffered),
        #                TS=1024 -> 24 MiB/buf (fine on v5e/v6e's 128 MiB).
        max_ts = 1024 if vmem_cap >= (96 << 20) else 512
        TS = max(8, (min(S, max_ts) // 8) * 8)
    grid = (pl.cdiv(B, TB), pl.cdiv(S, TS))
    needs_mask = (S % TS) != 0

    kernel = functools.partial(_head_kernel, seq_len=S, seq_tile=TS, needs_mask=needs_mask)

    # VMEM budget: double-buffered h tiles + double-buffered weights/output + scratch + headroom,
    # clamped below the physical per-core capacity.
    h_tile_bytes = TB * TS * H * itemsize
    weight_bytes = (H * HIDDEN + HIDDEN + HIDDEN * OUT_PAD + OUT_PAD) * 4
    out_tile_bytes = TB * OUT_PAD * 4
    acc_bytes = TB * H * 4
    budget = 2 * h_tile_bytes + 2 * weight_bytes + 2 * out_tile_bytes + acc_bytes + (4 << 20)
    vmem_limit = int(min(max(budget, 32 << 20), vmem_cap - (8 << 20)))

    cost = pl.CostEstimate(
        flops=int(B * S * H + 2 * B * (H * HIDDEN + HIDDEN * OUT_PAD)),
        transcendentals=int(B * OUT_PAD),
        bytes_accessed=int(B * S * H * itemsize + weight_bytes + B * OUT_PAD * 4),
    )

    out = pl.pallas_call(
        kernel,
        out_shape=jax.ShapeDtypeStruct((B, OUT_PAD), jnp.float32),
        grid=grid,
        in_specs=[
            pl.BlockSpec((TB, TS, H), lambda i, s: (i, s, 0)),        # streamed hidden states
            pl.BlockSpec((H, HIDDEN), lambda i, s: (0, 0)),           # w1 (VMEM-resident)
            pl.BlockSpec((1, HIDDEN), lambda i, s: (0, 0)),           # b1
            pl.BlockSpec((HIDDEN, OUT_PAD), lambda i, s: (0, 0)),     # w2 (padded)
            pl.BlockSpec((1, OUT_PAD), lambda i, s: (0, 0)),          # b2 (padded)
        ],
        out_specs=pl.BlockSpec((TB, OUT_PAD), lambda i, s: (i, 0)),   # constant over seq axis
        scratch_shapes=[pltpu.VMEM((TB, H), jnp.float32)],            # seq-sum accumulator
        compiler_params=pltpu.CompilerParams(
            dimension_semantics=("parallel", "arbitrary"),
            vmem_limit_bytes=vmem_limit,
        ),
        cost_estimate=cost,
    )(hidden_states, w1f, b1r, w2p, b2p)

    return out[:, :C]


def custom_model_forward(x, params):
    """Full CustomModel.forward.  x: (B, S, INPUT_DIM) inputs_embeds."""
    # TODO(synk): external `bert_model` stand-in is identity, so last_hidden_state == x.
    last_hidden_state = x
    return custom_model_head(last_hidden_state,
                             params["w1"], params["b1"],
                             params["w2"], params["b2"])


def _reference(x, params):
    pooled = jnp.mean(x, axis=1)
    z1 = jnp.maximum(pooled @ params["w1"] + params["b1"], 0.0)
    z2 = z1 @ params["w2"] + params["b2"]
    return jax.nn.sigmoid(z2)


def init_params(key):
    k1, k2, k3, k4 = jax.random.split(key, 4)
    lim1 = 1.0 / jnp.sqrt(INPUT_DIM)
    lim2 = 1.0 / jnp.sqrt(HIDDEN)
    return {
        "w1": jax.random.uniform(k1, (INPUT_DIM, HIDDEN), jnp.float32, -lim1, lim1),
        "b1": jax.random.uniform(k2, (HIDDEN,), jnp.float32, -lim1, lim1),
        "w2": jax.random.uniform(k3, (HIDDEN, NUM_CLASSES), jnp.float32, -lim2, lim2),
        "b2": jax.random.uniform(k4, (NUM_CLASSES,), jnp.float32, -lim2, lim2),
    }


if __name__ == "__main__":
    key = jax.random.PRNGKey(0)
    kx, kp, kx2 = jax.random.split(key, 3)
    params = init_params(kp)

    # --- small test (matches the module's natural shapes at toy size) ---
    B, S = 2, 8
    x = jax.random.normal(kx, (B, S, INPUT_DIM), jnp.float32)
    out = jax.block_until_ready(custom_model_forward(x, params))
    assert out.shape == (B, NUM_CLASSES)
    assert jnp.allclose(out, _reference(x, params), atol=5e-4, rtol=5e-4)

    # --- medium test: multi-tile grid, partial batch tile and the gated seq-mask path ---
    B2, S2 = 10, 1040
    x2 = jax.random.normal(kx2, (B2, S2, INPUT_DIM), jnp.float32)
    out2 = jax.block_until_ready(custom_model_forward(x2, params))
    assert out2.shape == (B2, NUM_CLASSES)
    assert jnp.allclose(out2, _reference(x2, params), atol=5e-4, rtol=5e-4)

    print("KERNEL_OK")
</pallas_src>

<mosaic_0001>
module attributes {stable_mosaic.version = 11 : i64} {
  func.func @_head_kernel(%arg0: i32, %arg1: i32, %arg2: memref<2x8x768xf32, #tpu.memory_space<vmem>>, %arg3: memref<768x256xf32, #tpu.memory_space<vmem>>, %arg4: memref<1x256xf32, #tpu.memory_space<vmem>>, %arg5: memref<256x128xf32, #tpu.memory_space<vmem>>, %arg6: memref<1x128xf32, #tpu.memory_space<vmem>>, %arg7: memref<2x128xf32, #tpu.memory_space<vmem>>, %arg8: memref<2x768xf32, #tpu.memory_space<vmem>>) attributes {dimension_semantics = [#tpu.dimension_semantics<parallel>, #tpu.dimension_semantics<arbitrary>], iteration_bounds = array<i64: 1, 1>, scalar_prefetch = 0 : i64, scratch_operands = 1 : i64, tpu.core_type = #tpu.core_type<tc>, window_params = [{transform_indices = @transform_0, window_bounds = array<i64: 2, 8, 768>}, {pipeline_mode = #tpu.pipeline_mode<synchronous>, transform_indices = @transform_1, window_bounds = array<i64: 768, 256>}, {pipeline_mode = #tpu.pipeline_mode<synchronous>, transform_indices = @transform_2, window_bounds = array<i64: 1, 256>}, {pipeline_mode = #tpu.pipeline_mode<synchronous>, transform_indices = @transform_3, window_bounds = array<i64: 256, 128>}, {pipeline_mode = #tpu.pipeline_mode<synchronous>, transform_indices = @transform_4, window_bounds = array<i64: 1, 128>}, {transform_indices = @transform_5, window_bounds = array<i64: 2, 128>}]} {
    %c0_i32 = arith.constant 0 : i32
    %0 = arith.cmpi eq, %arg1, %c0_i32 : i32
    %1 = arith.extui %0 : i1 to i32
    %c0_i32_0 = arith.constant 0 : i32
    %2 = arith.cmpi ne, %1, %c0_i32_0 : i32
    scf.if %2 {
      %cst_9 = arith.constant 0.000000e+00 : f32
      %11 = vector.broadcast %cst_9 : f32 to vector<2x768xf32>
      %c0_10 = arith.constant 0 : index
      %c0_11 = arith.constant 0 : index
      %12 = vector.load %arg8[%c0_10, %c0_11] : memref<2x768xf32, #tpu.memory_space<vmem>>, vector<2x768xf32>
      tpu.vector_store %arg8[%c0_10, %c0_11], %11 {strides = array<i32>} : memref<2x768xf32, #tpu.memory_space<vmem>>, vector<2x768xf32>,
    } else {
    }
    %c0 = arith.constant 0 : index
    %c0_1 = arith.constant 0 : index
    %c0_2 = arith.constant 0 : index
    %3 = vector.load %arg2[%c0, %c0_1, %c0_2] : memref<2x8x768xf32, #tpu.memory_space<vmem>>, vector<2x8x768xf32>
    %c0_3 = arith.constant 0 : index
    %c0_4 = arith.constant 0 : index
    %4 = vector.load %arg8[%c0_3, %c0_4] : memref<2x768xf32, #tpu.memory_space<vmem>>, vector<2x768xf32>
    %cst = arith.constant dense<0.000000e+00> : vector<2x768xf32>
    %5 = vector.multi_reduction <add>, %3, %cst [1] : vector<2x8x768xf32> to vector<2x768xf32>
    %6 = arith.addf %4, %5 : vector<2x768xf32>
    %c0_5 = arith.constant 0 : index
    %c0_6 = arith.constant 0 : index
    %7 = vector.load %arg8[%c0_5, %c0_6] : memref<2x768xf32, #tpu.memory_space<vmem>>, vector<2x768xf32>
    tpu.vector_store %arg8[%c0_5, %c0_6], %6 {strides = array<i32>} : memref<2x768xf32, #tpu.memory_space<vmem>>, vector<2x768xf32>,
    %c0_i32_7 = arith.constant 0 : i32
    %8 = arith.cmpi eq, %arg1, %c0_i32_7 : i32
    %9 = arith.extui %8 : i1 to i32
    %c0_i32_8 = arith.constant 0 : i32
    %10 = arith.cmpi ne, %9, %c0_i32_8 : i32
    scf.if %10 {
      %c0_9 = arith.constant 0 : index
      %c0_10 = arith.constant 0 : index
      %11 = vector.load %arg8[%c0_9, %c0_10] : memref<2x768xf32, #tpu.memory_space<vmem>>, vector<2x768xf32>
      %cst_11 = arith.constant 1.250000e-01 : f32
      %12 = vector.broadcast %cst_11 : f32 to vector<2x768xf32>
      %13 = arith.mulf %11, %12 : vector<2x768xf32>
      %c0_12 = arith.constant 0 : index
      %c0_13 = arith.constant 0 : index
      %14 = vector.load %arg3[%c0_12, %c0_13] : memref<768x256xf32, #tpu.memory_space<vmem>>, vector<768x256xf32>
      %cst_14 = arith.constant dense<0.000000e+00> : vector<2x256xf32>
      %15 = tpu.matmul %13, %14, %cst_14 {dimension_numbers = #tpu.dot_dimension_numbers<[1], [0], [0], [1], [0, 0, 1, 1], [], []>} : vector<2x768xf32>, vector<768x256xf32>, vector<2x256xf32> -> vector<2x256xf32>
      %c0_15 = arith.constant 0 : index
      %c0_16 = arith.constant 0 : index
      %16 = vector.load %arg4[%c0_15, %c0_16] : memref<1x256xf32, #tpu.memory_space<vmem>>, vector<1x256xf32>
      %17 = vector.broadcast %16 : vector<1x256xf32> to vector<2x256xf32>
      %18 = arith.addf %15, %17 : vector<2x256xf32>
      %cst_17 = arith.constant 0.000000e+00 : f32
      %19 = vector.broadcast %cst_17 : f32 to vector<2x256xf32>
      %20 = arith.maximumf %18, %19 : vector<2x256xf32>
      %c0_18 = arith.constant 0 : index
      %c0_19 = arith.constant 0 : index
      %21 = vector.load %arg5[%c0_18, %c0_19] : memref<256x128xf32, #tpu.memory_space<vmem>>, vector<256x128xf32>
      %cst_20 = arith.constant dense<0.000000e+00> : vector<2x128xf32>
      %22 = tpu.matmul %20, %21, %cst_20 {dimension_numbers = #tpu.dot_dimension_numbers<[1], [0], [0], [1], [0, 0, 1, 1], [], []>} : vector<2x256xf32>, vector<256x128xf32>, vector<2x128xf32> -> vector<2x128xf32>
      %c0_21 = arith.constant 0 : index
      %c0_22 = arith.constant 0 : index
      %23 = vector.load %arg6[%c0_21, %c0_22] : memref<1x128xf32, #tpu.memory_space<vmem>>, vector<1x128xf32>
      %24 = vector.broadcast %23 : vector<1x128xf32> to vector<2x128xf32>
      %25 = arith.addf %22, %24 : vector<2x128xf32>
      %26 = arith.negf %25 : vector<2x128xf32>
      %27 = math.exp %26 : vector<2x128xf32>
      %cst_23 = arith.constant 1.000000e+00 : f32
      %28 = vector.broadcast %cst_23 : f32 to vector<2x128xf32>
      %29 = arith.addf %28, %27 : vector<2x128xf32>
      %30 = arith.divf %28, %29 : vector<2x128xf32>
      %c0_24 = arith.constant 0 : index
      %c0_25 = arith.constant 0 : index
      %31 = vector.load %arg7[%c0_24, %c0_25] : memref<2x128xf32, #tpu.memory_space<vmem>>, vector<2x128xf32>
      tpu.vector_store %arg7[%c0_24, %c0_25], %30 {strides = array<i32>} : memref<2x128xf32, #tpu.memory_space<vmem>>, vector<2x128xf32>,
    } else {
    }
    return
  }
  func.func @transform_0(%arg0: i32, %arg1: i32) -> (i32, i32, i32) {
    %c0_i32 = arith.constant 0 : i32
    %c0_i32_0 = arith.constant 0 : i32
    return %arg0, %arg1, %c0_i32 : i32, i32, i32
  }
  func.func @transform_1(%arg0: i32, %arg1: i32) -> (i32, i32) {
    %c0_i32 = arith.constant 0 : i32
    %c0_i32_0 = arith.constant 0 : i32
    %c0_i32_1 = arith.constant 0 : i32
    return %c0_i32, %c0_i32_0 : i32, i32
  }
  func.func @transform_2(%arg0: i32, %arg1: i32) -> (i32, i32) {
    %c0_i32 = arith.constant 0 : i32
    %c0_i32_0 = arith.constant 0 : i32
    %c0_i32_1 = arith.constant 0 : i32
    return %c0_i32, %c0_i32_0 : i32, i32
  }
  func.func @transform_3(%arg0: i32, %arg1: i32) -> (i32, i32) {
    %c0_i32 = arith.constant 0 : i32
    %c0_i32_0 = arith.constant 0 : i32
    %c0_i32_1 = arith.constant 0 : i32
    return %c0_i32, %c0_i32_0 : i32, i32
  }
  func.func @transform_4(%arg0: i32, %arg1: i32) -> (i32, i32) {
    %c0_i32 = arith.constant 0 : i32
    %c0_i32_0 = arith.constant 0 : i32
    %c0_i32_1 = arith.constant 0 : i32
    return %c0_i32, %c0_i32_0 : i32, i32
  }
  func.func @transform_5(%arg0: i32, %arg1: i32) -> (i32, i32) {
    %c0_i32 = arith.constant 0 : i32
    %c0_i32_0 = arith.constant 0 : i32
    return %arg0, %c0_i32 : i32, i32
  }
}

</mosaic_0001>

<llo_original>
// kernel: tpu_custom_call.1
$region0: #{tpu_custom_call.1}
  #allocation0 [shape = 'u32[]', space=smem, size = 0x4, offset = 0x4, fixed_abs, tag = 'smem constant byte address 0x4 - core index']
  #allocation1 [shape = 'u32[144,128]{1,0:T(1,128)}', space=vmem, size = 0x12000, scoped, tag = 'internal scratch']
  #allocation2 [shape = 'f32[2,768]{1,0:T(2,128)}', space=vmem, size = 0x1800, scoped, tag = 'scratch operand']
  %s0 = inlined_call_operand.hbm [shape: f32[2,8,768], index: 0, kind: input, shape index: {}]
  %s1 = inlined_call_operand.hbm [shape: f32[768,256], index: 1, kind: input, shape index: {}]
  %s2 = inlined_call_operand.vmem [shape: f32[1,256], index: 2, kind: input, shape index: {}]
  %s3 = inlined_call_operand.hbm [shape: f32[256,128], index: 3, kind: input, shape index: {}]
  %s4 = inlined_call_operand.vmem [shape: f32[1,128], index: 4, kind: input, shape index: {}]
  %s5 = inlined_call_operand.hbm [shape: f32[2,128], index: 5, kind: output, shape index: {}]
  %s6 = sld [smem:[#allocation0]]
  $region50: #{tpu_custom_call.1} parent=0
    _
  %s8 = ssub.s32 1, %s6
  %s9 = scalar_select 0, %s8, %s6
  $region1: #{tpu_custom_call.1} parent=0
    #allocation3 [shape = 'u8[49152]{0}', space=vmem, size = 0xc000, scoped, tag = 'input window, operand 0, single buffered']
    #allocation4 [shape = 's32[1]{0}', space=sflag, size = 0x4, scoped, tag = 'scoped memory for tpu_custom_call.1']
    #allocation5 [shape = 's32[1]{0}', space=sflag, size = 0x4, scoped, tag = 'scoped memory for tpu_custom_call.1']
    #allocation6 [shape = 'u8[786432]{0}', space=vmem, size = 0xc0000, scoped, tag = 'input window, operand 1, single buffered']
    #allocation7 [shape = 's32[1]{0}', space=sflag, size = 0x4, scoped, tag = 'scoped memory for tpu_custom_call.1']
    #allocation8 [shape = 'u8[131072]{0}', space=vmem, size = 0x20000, scoped, tag = 'input window, operand 3, single buffered']
    #allocation9 [shape = 'u8[1024]{0}', space=vmem, size = 0x400, scoped, tag = 'output window, operand 0, single buffered']
    %10 = vsyncpa [#allocation4], 0
    %11 = vsyncpa [#allocation7], 0
    %12 = vsyncpa [#allocation5], 0
    // Predicated region
    $region2: #{tpu_custom_call.1} parent=1 // pred_check
      _
    $region3: #{tpu_custom_call.1} parent=1 // pred_check_branch
      %14 = sbr.rel (0) target = $region5
    $region4: #{tpu_custom_call.1} parent=1 // pred_region
      %s16 = ssub.s32 1536, 1536
      %17 = vsyncadd [#allocation4], %s16
      %s18 = sshll.u32 [#allocation3], 4
      %s19 = int_to_ptr.vmem [resolvable:$true] %s18
      %24 = dma.hbm_to_vmem [thread:$0]  %s0, 1536, %s19, [#allocation4], 768, 768, 48
    $region5: #{tpu_custom_call.1} parent=1 // pred_fallthru
      _
    // Predicated region
    $region6: #{tpu_custom_call.1} parent=1 // pred_check
      _
    $region7: #{tpu_custom_call.1} parent=1 // pred_check_branch
      %26 = sbr.rel (0) target = $region9
    $region8: #{tpu_custom_call.1} parent=1 // pred_region
      %s28 = ssub.s32 24576, 24576
      %29 = vsyncadd [#allocation7], %s28
      %s30 = sshll.u32 [#allocation6], 4
      %s31 = int_to_ptr.vmem [resolvable:$true] %s30
      %36 = dma.hbm_to_vmem [thread:$0]  %s1, 24576, %s31, [#allocation7], 256, 256, 16
    $region9: #{tpu_custom_call.1} parent=1 // pred_fallthru
      _
    // Predicated region
    $region10: #{tpu_custom_call.1} parent=1 // pred_check
      _
    $region11: #{tpu_custom_call.1} parent=1 // pred_check_branch
      %38 = sbr.rel (0) target = $region13
    $region12: #{tpu_custom_call.1} parent=1 // pred_region
      _
    $region13: #{tpu_custom_call.1} parent=1 // pred_fallthru
      _
    // Predicated region
    $region14: #{tpu_custom_call.1} parent=1 // pred_check
      _
    $region15: #{tpu_custom_call.1} parent=1 // pred_check_branch
      %40 = sbr.rel (0) target = $region17
    $region16: #{tpu_custom_call.1} parent=1 // pred_region
      %s42 = ssub.s32 4096, 4096
      %43 = vsyncadd [#allocation7], %s42
      %s44 = sshll.u32 [#allocation8], 4
      %s45 = int_to_ptr.vmem [resolvable:$true] %s44
      %50 = dma.hbm_to_vmem [thread:$0]  %s3, 4096, %s45, [#allocation7], 128, 128, 8
    $region17: #{tpu_custom_call.1} parent=1 // pred_fallthru
      _
    // Predicated region
    $region18: #{tpu_custom_call.1} parent=1 // pred_check
      _
    $region19: #{tpu_custom_call.1} parent=1 // pred_check_branch
      %52 = sbr.rel (0) target = $region21
    $region20: #{tpu_custom_call.1} parent=1 // pred_region
      _
    $region21: #{tpu_custom_call.1} parent=1 // pred_fallthru
      _
    // Predicated region
    $region22: #{tpu_custom_call.1} parent=1 // pred_check
      _
    $region23: #{tpu_custom_call.1} parent=1 // pred_check_branch
      %54 = sbr.rel (0) target = $region25
    $region24: #{tpu_custom_call.1} parent=1 // pred_region
      %55 = dma.done [#allocation4], 1536
    $region25: #{tpu_custom_call.1} parent=1 // pred_fallthru
      _
    // Predicated region
    $region26: #{tpu_custom_call.1} parent=1 // pred_check
      _
    $region27: #{tpu_custom_call.1} parent=1 // pred_check_branch
      %57 = sbr.rel (0) target = $region29
    $region28: #{tpu_custom_call.1} parent=1 // pred_region
      %58 = dma.done [#allocation7], 24576
    $region29: #{tpu_custom_call.1} parent=1 // pred_fallthru
      _
    // Predicated region
    $region30: #{tpu_custom_call.1} parent=1 // pred_check
      _
    $region31: #{tpu_custom_call.1} parent=1 // pred_check_branch
      %60 = sbr.rel (0) target = $region33
    $region32: #{tpu_custom_call.1} parent=1 // pred_region
      %61 = dma.done [#allocation7], 4096
    $region33: #{tpu_custom_call.1} parent=1 // pred_fallthru
      _
    %p62 = scmp.eq.s32.totalorder 0, 0
    // Predicated region
    $region34: #{tpu_custom_call.1} parent=1 // pred_check
      %p63 = pneg %p62
    $region35: #{tpu_custom_call.1} parent=1 // pred_check_branch
      %65 = sbr.rel (%p63) target = $region37
    $region36: #{tpu_custom_call.1} parent=1 // pred_region
      %66 = vst [vmem:[#allocation2] sm:$0xff] 0.0
      %67 = vst [vmem:[#allocation2 + $0x8] sm:$0xf] 0.0
    $region37: #{tpu_custom_call.1} parent=1 // pred_fallthru
      _
    %v68 = vld [vmem:[#allocation3] sm:$0xff]
    %v69 = vld [vmem:[#allocation3 + $0x8] sm:$0xff]
    %v70 = vld [vmem:[#allocation3 + $0x10] sm:$0xff]
    %v71 = vld [vmem:[#allocation3 + $0x18] sm:$0xff]
    %v72 = vld [vmem:[#allocation3 + $0x20] sm:$0xff]
    %v73 = vld [vmem:[#allocation3 + $0x28] sm:$0xff]
    %v74 = vld [vmem:[#allocation3 + $0x30] sm:$0xff]
    %v75 = vld [vmem:[#allocation3 + $0x38] sm:$0xff]
    %v76 = vld [vmem:[#allocation3 + $0x40] sm:$0xff]
    %v77 = vld [vmem:[#allocation3 + $0x48] sm:$0xff]
    %v78 = vld [vmem:[#allocation3 + $0x50] sm:$0xff]
    %v79 = vld [vmem:[#allocation3 + $0x58] sm:$0xff]
    %v80 = vld [vmem:[#allocation2] sm:$0xff]
    %v81 = vld [vmem:[#allocation2 + $0x8] sm:$0xf]
    %v82 = vrot.slane %v68, 4
    %v83 = vadd.f32 %v68, %v82
    %v84 = vrot.slane %v83, 2
    %v85 = vadd.f32 %v83, %v84
    %v86 = vrot.slane %v85, 1
    %v87 = vadd.f32 %v85, %v86
    %v88 = vrot.slane %v69, 4
    %v89 = vadd.f32 %v69, %v88
    %v90 = vrot.slane %v89, 2
    %v91 = vadd.f32 %v89, %v90
    %v92 = vrot.slane %v91, 1
    %v93 = vadd.f32 %v91, %v92
    %v94 = vrot.slane %v70, 4
    %v95 = vadd.f32 %v70, %v94
    %v96 = vrot.slane %v95, 2
    %v97 = vadd.f32 %v95, %v96
    %v98 = vrot.slane %v97, 1
    %v99 = vadd.f32 %v97, %v98
    %v100 = vrot.slane %v71, 4
    %v101 = vadd.f32 %v71, %v100
    %v102 = vrot.slane %v101, 2
    %v103 = vadd.f32 %v101, %v102
    %v104 = vrot.slane %v103, 1
    %v105 = vadd.f32 %v103, %v104
    %v106 = vrot.slane %v72, 4
    %v107 = vadd.f32 %v72, %v106
    %v108 = vrot.slane %v107, 2
    %v109 = vadd.f32 %v107, %v108
    %v110 = vrot.slane %v109, 1
    %v111 = vadd.f32 %v109, %v110
    %v112 = vrot.slane %v73, 4
    %v113 = vadd.f32 %v73, %v112
    %v114 = vrot.slane %v113, 2
    %v115 = vadd.f32 %v113, %v114
    %v116 = vrot.slane %v115, 1
    %v117 = vadd.f32 %v115, %v116
    %v118 = vrot.slane %v74, 4
    %v119 = vadd.f32 %v74, %v118
    %v120 = vrot.slane %v119, 2
    %v121 = vadd.f32 %v119, %v120
    %v122 = vrot.slane %v121, 1
    %v123 = vadd.f32 %v121, %v122
    %v124 = vrot.slane %v75, 4
    %v125 = vadd.f32 %v75, %v124
    %v126 = vrot.slane %v125, 2
    %v127 = vadd.f32 %v125, %v126
    %v128 = vrot.slane %v127, 1
    %v129 = vadd.f32 %v127, %v128
    %v130 = vrot.slane %v76, 4
    %v131 = vadd.f32 %v76, %v130
    %v132 = vrot.slane %v131, 2
    %v133 = vadd.f32 %v131, %v132
    %v134 = vrot.slane %v133, 1
    %v135 = vadd.f32 %v133, %v134
    %v136 = vrot.slane %v77, 4
    %v137 = vadd.f32 %v77, %v136
    %v138 = vrot.slane %v137, 2
    %v139 = vadd.f32 %v137, %v138
    %v140 = vrot.slane %v139, 1
    %v141 = vadd.f32 %v139, %v140
    %v142 = vrot.slane %v78, 4
    %v143 = vadd.f32 %v78, %v142
    %v144 = vrot.slane %v143, 2
    %v145 = vadd.f32 %v143, %v144
    %v146 = vrot.slane %v145, 1
    %v147 = vadd.f32 %v145, %v146
    %v148 = vrot.slane %v79, 4
    %v149 = vadd.f32 %v79, %v148
    %v150 = vrot.slane %v149, 2
    %v151 = vadd.f32 %v149, %v150
    %v152 = vrot.slane %v151, 1
    %v153 = vadd.f32 %v151, %v152
    %v166 = vcombine.low %v87, %v93
    %v167 = vcombine.low %v99, %v105
    %v169 = vunpack.c.l.s4 1983009808
    %v170 = vunpack.c.0.s8 %v169
    %v171 = vlaneseq
    %v172 = vshrl.u32 %v171, 7
    %v173 = vsub.s32 %v170, %v172
    %v174 = vrot.slane %v166, %v173
    %v176 = vunpack.c.l.s4 1983009808
    %v177 = vunpack.c.0.s8 %v176
    %v178 = vlaneseq
    %v179 = vshrl.u32 %v178, 7
    %v180 = vsub.s32 %v177, %v179
    %v181 = vrot.slane %v167, %v180
    %v182 = vcombine.low %v174, %v181
    %v183 = vcombine.low %v111, %v117
    %v185 = vunpack.c.l.s4 1983009808
    %v186 = vunpack.c.0.s8 %v185
    %v187 = vlaneseq
    %v188 = vshrl.u32 %v187, 7
    %v189 = vsub.s32 %v186, %v188
    %v190 = vrot.slane %v183, %v189
    %v191 = vcombine.low %v123, %v129
    %v192 = vcombine.low %v135, %v141
    %v194 = vunpack.c.l.s4 1983009808
    %v195 = vunpack.c.0.s8 %v194
    %v196 = vlaneseq
    %v197 = vshrl.u32 %v196, 7
    %v198 = vsub.s32 %v195, %v197
    %v199 = vrot.slane %v191, %v198
    %v201 = vunpack.c.l.s4 1983009808
    %v202 = vunpack.c.0.s8 %v201
    %v203 = vlaneseq
    %v204 = vshrl.u32 %v203, 7
    %v205 = vsub.s32 %v202, %v204
    %v206 = vrot.slane %v192, %v205
    %v207 = vcombine.low %v199, %v206
    %v208 = vcombine.low %v147, %v153
    %v210 = vunpack.c.l.s4 1983009808
    %v211 = vunpack.c.0.s8 %v210
    %v212 = vlaneseq
    %v213 = vshrl.u32 %v212, 7
    %v214 = vsub.s32 %v211, %v213
    %v215 = vrot.slane %v208, %v214
    %vm216 = vcmask 1044484
    %v217 = vsel %vm216, %v182, %v182
    %vm218 = vcmask 1046534
    %v219 = vsel %vm218, %v182, %v217
    %v220 = vrot.slane %v207, 7
    %vm221 = vcmask 1041409
    %v222 = vsel %vm221, %v220, %v219
    %vm223 = vcmask 1043459
    %v224 = vsel %vm223, %v220, %v222
    %vm225 = vcmask 1045509
    %v226 = vsel %vm225, %v220, %v224
    %vm227 = vcmask 1047559
    %v228 = vsel %vm227, %v220, %v226
    %v229 = vsel %vm216, %v190, %v190
    %v230 = vsel %vm218, %v190, %v229
    %v231 = vrot.slane %v215, 7
    %v232 = vsel %vm221, %v231, %v230
    %v233 = vsel %vm223, %v231, %v232
    %v234 = vsel %vm225, %v231, %v233
    %v235 = vsel %vm227, %v231, %v234
    %v238 = vadd.f32 %v80, %v228
    %v239 = vadd.f32 %v81, %v235
    %240 = vst [vmem:[#allocation2] sm:$0xff] %v238
    %241 = vst [vmem:[#allocation2 + $0x8] sm:$0xf] %v239
    // Predicated region
    $region38: #{tpu_custom_call.1} parent=1 // pred_check
      %p242 = pneg %p62
    $region39: #{tpu_custom_call.1} parent=1 // pred_check_branch
      %244 = sbr.rel (%p242) target = $region41
    $region40: #{tpu_custom_call.1} parent=1 // pred_region
      %v245 = vld [vmem:[#allocation2] sm:$0xff]
      %v246 = vld [vmem:[#allocation2 + $0x8] sm:$0xf]
      %v247 = vmul.f32 %v245, 0.125
      %v248 = vmul.f32 %v246, 0.125
      %v249 = vld [vmem:[#allocation6] sm:$0xff]
      %v250 = vld [vmem:[#allocation6 + $0x8] sm:$0xff]
      %v251 = vld [vmem:[#allocation6 + $0x10] sm:$0xff]
      %v252 = vld [vmem:[#allocation6 + $0x18] sm:$0xff]
      %v253 = vld [vmem:[#allocation6 + $0x20] sm:$0xff]
      %v254 = vld [vmem:[#allocation6 + $0x28] sm:$0xff]
      %v255 = vld [vmem:[#allocation6 + $0x30] sm:$0xff]
      %v256 = vld [vmem:[#allocation6 + $0x38] sm:$0xff]
      %v257 = vld [vmem:[#allocation6 + $0x40] sm:$0xff]
      %v258 = vld [vmem:[#allocation6 + $0x48] sm:$0xff]
      %v259 = vld [vmem:[#allocation6 + $0x50] sm:$0xff]
      %v260 = vld [vmem:[#allocation6 + $0x58] sm:$0xff]
      %v261 = vld [vmem:[#allocation6 + $0x60] sm:$0xff]
      %v262 = vld [vmem:[#allocation6 + $0x68] sm:$0xff]
      %v263 = vld [vmem:[#allocation6 + $0x70] sm:$0xff]
      %v264 = vld [vmem:[#allocation6 + $0x78] sm:$0xff]
      %v265 = vld [vmem:[#allocation6 + $0x80] sm:$0xff]
      %v266 = vld [vmem:[#allocation6 + $0x88] sm:$0xff]
      %v267 = vld [vmem:[#allocation6 + $0x90] sm:$0xff]
      %v268 = vld [vmem:[#allocation6 + $0x98] sm:$0xff]
      %v269 = vld [vmem:[#allocation6 + $0xa0] sm:$0xff]
      %v270 = vld [vmem:[#allocation6 + $0xa8] sm:$0xff]
      %v271 = vld [vmem:[#allocation6 + $0xb0] sm:$0xff]
      %v272 = vld [vmem:[#allocation6 + $0xb8] sm:$0xff]
      %v273 = vld [vmem:[#allocation6 + $0xc0] sm:$0xff]
      %v274 = vld [vmem:[#allocation6 + $0xc8] sm:$0xff]
      %v275 = vld [vmem:[#allocation6 + $0xd0] sm:$0xff]
      %v276 = vld [vmem:[#allocation6 + $0xd8] sm:$0xff]
      %v277 = vld [vmem:[#allocation6 + $0xe0] sm:$0xff]
      %v278 = vld [vmem:[#allocation6 + $0xe8] sm:$0xff]
      %v279 = vld [vmem:[#allocation6 + $0xf0] sm:$0xff]
      %v280 = vld [vmem:[#allocation6 + $0xf8] sm:$0xff]
      %v281 = vld [vmem:[#allocation6 + $0x100] sm:$0xff]
      %v282 = vld [vmem:[#allocation6 + $0x108] sm:$0xff]
      %v283 = vld [vmem:[#allocation6 + $0x110] sm:$0xff]
      %v284 = vld [vmem:[#allocation6 + $0x118] sm:$0xff]
      %v285 = vld [vmem:[#allocation6 + $0x120] sm:$0xff]
      %v286 = vld [vmem:[#allocation6 + $0x128] sm:$0xff]
      %v287 = vld [vmem:[#allocation6 + $0x130] sm:$0xff]
      %v288 = vld [vmem:[#allocation6 + $0x138] sm:$0xff]
      %v289 = vld [vmem:[#allocation6 + $0x140] sm:$0xff]
      %v290 = vld [vmem:[#allocation6 + $0x148] sm:$0xff]
      %v291 = vld [vmem:[#allocation6 + $0x150] sm:$0xff]
      %v292 = vld [vmem:[#allocation6 + $0x158] sm:$0xff]
      %v293 = vld [vmem:[#allocation6 + $0x160] sm:$0xff]
      %v294 = vld [vmem:[#allocation6 + $0x168] sm:$0xff]
      %v295 = vld [vmem:[#allocation6 + $0x170] sm:$0xff]
      %v296 = vld [vmem:[#allocation6 + $0x178] sm:$0xff]
      %v297 = vld [vmem:[#allocation6 + $0x180] sm:$0xff]
      %v298 = vld [vmem:[#allocation6 + $0x188] sm:$0xff]
      %v299 = vld [vmem:[#allocation6 + $0x190] sm:$0xff]
      %v300 = vld [vmem:[#allocation6 + $0x198] sm:$0xff]
      %v301 = vld [vmem:[#allocation6 + $0x1a0] sm:$0xff]
      %v302 = vld [vmem:[#allocation6 + $0x1a8] sm:$0xff]
      %v303 = vld [vmem:[#allocation6 + $0x1b0] sm:$0xff]
      %v304 = vld [vmem:[#allocation6 + $0x1b8] sm:$0xff]
      %v305 = vld [vmem:[#allocation6 + $0x1c0] sm:$0xff]
      %v306 = vld [vmem:[#allocation6 + $0x1c8] sm:$0xff]
      %v307 = vld [vmem:[#allocation6 + $0x1d0] sm:$0xff]
      %v308 = vld [vmem:[#allocation6 + $0x1d8] sm:$0xff]
      %v309 = vld [vmem:[#allocation6 + $0x1e0] sm:$0xff]
      %v310 = vld [vmem:[#allocation6 + $0x1e8] sm:$0xff]
      %v311 = vld [vmem:[#allocation6 + $0x1f0] sm:$0xff]
      %v312 = vld [vmem:[#allocation6 + $0x1f8] sm:$0xff]
      %v313 = vld [vmem:[#allocation6 + $0x200] sm:$0xff]
      %v314 = vld [vmem:[#allocation6 + $0x208] sm:$0xff]
      %v315 = vld [vmem:[#allocation6 + $0x210] sm:$0xff]
      %v316 = vld [vmem:[#allocation6 + $0x218] sm:$0xff]
      %v317 = vld [vmem:[#allocation6 + $0x220] sm:$0xff]
      %v318 = vld [vmem:[#allocation6 + $0x228] sm:$0xff]
      %v319 = vld [vmem:[#allocation6 + $0x230] sm:$0xff]
      %v320 = vld [vmem:[#allocation6 + $0x238] sm:$0xff]
      %v321 = vld [vmem:[#allocation6 + $0x240] sm:$0xff]
      %v322 = vld [vmem:[#allocation6 + $0x248] sm:$0xff]
      %v323 = vld [vmem:[#allocation6 + $0x250] sm:$0xff]
      %v324 = vld [vmem:[#allocation6 + $0x258] sm:$0xff]
      %v325 = vld [vmem:[#allocation6 + $0x260] sm:$0xff]
      %v326 = vld [vmem:[#allocation6 + $0x268] sm:$0xff]
      %v327 = vld [vmem:[#allocation6 + $0x270] sm:$0xff]
      %v328 = vld [vmem:[#allocation6 + $0x278] sm:$0xff]
      %v329 = vld [vmem:[#allocation6 + $0x280] sm:$0xff]
      %v330 = vld [vmem:[#allocation6 + $0x288] sm:$0xff]
      %v331 = vld [vmem:[#allocation6 + $0x290] sm:$0xff]
      %v332 = vld [vmem:[#allocation6 + $0x298] sm:$0xff]
      %v333 = vld [vmem:[#allocation6 + $0x2a0] sm:$0xff]
      %v334 = vld [vmem:[#allocation6 + $0x2a8] sm:$0xff]
      %v335 = vld [vmem:[#allocation6 + $0x2b0] sm:$0xff]
      %v336 = vld [vmem:[#allocation6 + $0x2b8] sm:$0xff]
      %v337 = vld [vmem:[#allocation6 + $0x2c0] sm:$0xff]
      %v338 = vld [vmem:[#allocation6 + $0x2c8] sm:$0xff]
      %v339 = vld [vmem:[#allocation6 + $0x2d0] sm:$0xff]
      %v340 = vld [vmem:[#allocation6 + $0x2d8] sm:$0xff]
      %v341 = vld [vmem:[#allocation6 + $0x2e0] sm:$0xff]
      %v342 = vld [vmem:[#allocation6 + $0x2e8] sm:$0xff]
      %v343 = vld [vmem:[#allocation6 + $0x2f0] sm:$0xff]
      %v344 = vld [vmem:[#allocation6 + $0x2f8] sm:$0xff]
      %v345 = vld [vmem:[#allocation6 + $0x300] sm:$0xff]
      %v346 = vld [vmem:[#allocation6 + $0x308] sm:$0xff]
      %v347 = vld [vmem:[#allocation6 + $0x310] sm:$0xff]
      %v348 = vld [vmem:[#allocation6 + $0x318] sm:$0xff]
      %v349 = vld [vmem:[#allocation6 + $0x320] sm:$0xff]
      %v350 = vld [vmem:[#allocation6 + $0x328] sm:$0xff]
      %v351 = vld [vmem:[#allocation6 + $0x330] sm:$0xff]
      %v352 = vld [vmem:[#allocation6 + $0x338] sm:$0xff]
      %v353 = vld [vmem:[#allocation6 + $0x340] sm:$0xff]
      %v354 = vld [vmem:[#allocation6 + $0x348] sm:$0xff]
      %v355 = vld [vmem:[#allocation6 + $0x350] sm:$0xff]
      %v356 = vld [vmem:[#allocation6 + $0x358] sm:$0xff]
      %v357 = vld [vmem:[#allocation6 + $0x360] sm:$0xff]
      %v358 = vld [vmem:[#allocation6 + $0x368] sm:$0xff]
      %v359 = vld [vmem:[#allocation6 + $0x370] sm:$0xff]
      %v360 = vld [vmem:[#allocation6 + $0x378] sm:$0xff]
      %v361 = vld [vmem:[#allocation6 + $0x380] sm:$0xff]
      %v362 = vld [vmem:[#allocation6 + $0x388] sm:$0xff]
      %v363 = vld [vmem:[#allocation6 + $0x390] sm:$0xff]
      %v364 = vld [vmem:[#allocation6 + $0x398] sm:$0xff]
      %v365 = vld [vmem:[#allocation6 + $0x3a0] sm:$0xff]
      %v366 = vld [vmem:[#allocation6 + $0x3a8] sm:$0xff]
      %v367 = vld [vmem:[#allocation6 + $0x3b0] sm:$0xff]
      %v368 = vld [vmem:[#allocation6 + $0x3b8] sm:$0xff]
      %v369 = vld [vmem:[#allocation6 + $0x3c0] sm:$0xff]
      %v370 = vld [vmem:[#allocation6 + $0x3c8] sm:$0xff]
      %v371 = vld [vmem:[#allocation6 + $0x3d0] sm:$0xff]
      %v372 = vld [vmem:[#allocation6 + $0x3d8] sm:$0xff]
      %v373 = vld [vmem:[#allocation6 + $0x3e0] sm:$0xff]
      %v374 = vld [vmem:[#allocation6 + $0x3e8] sm:$0xff]
      %v375 = vld [vmem:[#allocation6 + $0x3f0] sm:$0xff]
      %v376 = vld [vmem:[#allocation6 + $0x3f8] sm:$0xff]
      %v377 = vld [vmem:[#allocation6 + $0x400] sm:$0xff]
      %v378 = vld [vmem:[#allocation6 + $0x408] sm:$0xff]
      %v379 = vld [vmem:[#allocation6 + $0x410] sm:$0xff]
      %v380 = vld [vmem:[#allocation6 + $0x418] sm:$0xff]
      %v381 = vld [vmem:[#allocation6 + $0x420] sm:$0xff]
      %v382 = vld [vmem:[#allocation6 + $0x428] sm:$0xff]
      %v383 = vld [vmem:[#allocation6 + $0x430] sm:$0xff]
      %v384 = vld [vmem:[#allocation6 + $0x438] sm:$0xff]
      %v385 = vld [vmem:[#allocation6 + $0x440] sm:$0xff]
      %v386 = vld [vmem:[#allocation6 + $0x448] sm:$0xff]
      %v387 = vld [vmem:[#allocation6 + $0x450] sm:$0xff]
      %v388 = vld [vmem:[#allocation6 + $0x458] sm:$0xff]
      %v389 = vld [vmem:[#allocation6 + $0x460] sm:$0xff]
      %v390 = vld [vmem:[#allocation6 + $0x468] sm:$0xff]
      %v391 = vld [vmem:[#allocation6 + $0x470] sm:$0xff]
      %v392 = vld [vmem:[#allocation6 + $0x478] sm:$0xff]
      %v393 = vld [vmem:[#allocation6 + $0x480] sm:$0xff]
      %v394 = vld [vmem:[#allocation6 + $0x488] sm:$0xff]
      %v395 = vld [vmem:[#allocation6 + $0x490] sm:$0xff]
      %v396 = vld [vmem:[#allocation6 + $0x498] sm:$0xff]
      %v397 = vld [vmem:[#allocation6 + $0x4a0] sm:$0xff]
      %v398 = vld [vmem:[#allocation6 + $0x4a8] sm:$0xff]
      %v399 = vld [vmem:[#allocation6 + $0x4b0] sm:$0xff]
      %v400 = vld [vmem:[#allocation6 + $0x4b8] sm:$0xff]
      %v401 = vld [vmem:[#allocation6 + $0x4c0] sm:$0xff]
      %v402 = vld [vmem:[#allocation6 + $0x4c8] sm:$0xff]
      %v403 = vld [vmem:[#allocation6 + $0x4d0] sm:$0xff]
      %v404 = vld [vmem:[#allocation6 + $0x4d8] sm:$0xff]
      %v405 = vld [vmem:[#allocation6 + $0x4e0] sm:$0xff]
      %v406 = vld [vmem:[#allocation6 + $0x4e8] sm:$0xff]
      %v407 = vld [vmem:[#allocation6 + $0x4f0] sm:$0xff]
      %v408 = vld [vmem:[#allocation6 + $0x4f8] sm:$0xff]
      %v409 = vld [vmem:[#allocation6 + $0x500] sm:$0xff]
      %v410 = vld [vmem:[#allocation6 + $0x508] sm:$0xff]
      %v411 = vld [vmem:[#allocation6 + $0x510] sm:$0xff]
      %v412 = vld [vmem:[#allocation6 + $0x518] sm:$0xff]
      %v413 = vld [vmem:[#allocation6 + $0x520] sm:$0xff]
      %v414 = vld [vmem:[#allocation6 + $0x528] sm:$0xff]
      %v415 = vld [vmem:[#allocation6 + $0x530] sm:$0xff]
      %v416 = vld [vmem:[#allocation6 + $0x538] sm:$0xff]
      %v417 = vld [vmem:[#allocation6 + $0x540] sm:$0xff]
      %v418 = vld [vmem:[#allocation6 + $0x548] sm:$0xff]
      %v419 = vld [vmem:[#allocation6 + $0x550] sm:$0xff]
      %v420 = vld [vmem:[#allocation6 + $0x558] sm:$0xff]
      %v421 = vld [vmem:[#allocation6 + $0x560] sm:$0xff]
      %v422 = vld [vmem:[#allocation6 + $0x568] sm:$0xff]
      %v423 = vld [vmem:[#allocation6 + $0x570] sm:$0xff]
      %v424 = vld [vmem:[#allocation6 + $0x578] sm:$0xff]
      %v425 = vld [vmem:[#allocation6 + $0x580] sm:$0xff]
      %v426 = vld [vmem:[#allocation6 + $0x588] sm:$0xff]
      %v427 = vld [vmem:[#allocation6 + $0x590] sm:$0xff]
      %v428 = vld [vmem:[#allocation6 + $0x598] sm:$0xff]
      %v429 = vld [vmem:[#allocation6 + $0x5a0] sm:$0xff]
      %v430 = vld [vmem:[#allocation6 + $0x5a8] sm:$0xff]
      %v431 = vld [vmem:[#allocation6 + $0x5b0] sm:$0xff]
      %v432 = vld [vmem:[#allocation6 + $0x5b8] sm:$0xff]
      %v433 = vld [vmem:[#allocation6 + $0x5c0] sm:$0xff]
      %v434 = vld [vmem:[#allocation6 + $0x5c8] sm:$0xff]
      %v435 = vld [vmem:[#allocation6 + $0x5d0] sm:$0xff]
      %v436 = vld [vmem:[#allocation6 + $0x5d8] sm:$0xff]
      %v437 = vld [vmem:[#allocation6 + $0x5e0] sm:$0xff]
      %v438 = vld [vmem:[#allocation6 + $0x5e8] sm:$0xff]
      %v439 = vld [vmem:[#allocation6 + $0x5f0] sm:$0xff]
      %v440 = vld [vmem:[#allocation6 + $0x5f8] sm:$0xff]
      %v441 = vld [vmem:[%s2] sm:$0x3]
      %v443 = vlaneseq
      %v444 = vshrl.u32 %v443, 7
      %v445 = vsub.s32 0, %v444
      %v446 = vrot.slane %v441, %v445
      %v447 = vlaneseq
      %v448 = vshrl.u32 %v447, 7
      %v449 = vsub.s32 1, %v448
      %v450 = vrot.slane %v441, %v449
      %v455 = vcombine.high %v247, %v247
      %v457 = vunpack.c.l.s4 1983009808
      %v458 = vunpack.c.0.s8 %v457
      %v459 = vlaneseq
      %v460 = vshrl.u32 %v459, 7
      %v461 = vsub.s32 %v458, %v460
      %v462 = vrot.slane %v247, %v461
      %v464 = vunpack.c.l.s4 1983009808
      %v465 = vunpack.c.0.s8 %v464
      %v466 = vlaneseq
      %v467 = vshrl.u32 %v466, 7
      %v468 = vsub.s32 %v465, %v467
      %v469 = vrot.slane %v455, %v468
      %v470 = vcombine.high %v462, %v462
      %v471 = vcombine.high %v469, %v469
      %v473 = vunpack.c.l.s4 1983009808
      %v474 = vunpack.c.0.s8 %v473
      %v475 = vlaneseq
      %v476 = vshrl.u32 %v475, 7
      %v477 = vsub.s32 %v474, %v476
      %v478 = vrot.slane %v248, %v477
      %v479 = vcombine.high %v478, %v478
      %486 = vmatprep.subr.mxu0 %v250
      %487 = vmatpush1.msra.mxu0 %v249
      %488 = vmatprep.subr.mxu0 %v252
      %489 = vmatpush1.msra.mxu0 %v251
      %490 = vmatprep.subr.mxu0 %v254
      %491 = vmatpush1.msra.mxu0 %v253
      %492 = vmatprep.subr.mxu0 %v256
      %493 = vmatpush1.msra.mxu0 %v255
      %494 = vmatprep.subr.mxu0 %v258
      %495 = vmatpush1.msra.mxu0 %v257
      %496 = vmatprep.subr.mxu0 %v260
      %497 = vmatpush1.msra.mxu0 %v259
      %498 = vmatprep.subr.mxu0 %v262
      %499 = vmatpush1.msra.mxu0 %v261
      %500 = vmatprep.subr.mxu0 %v264
      %501 = vmatpush1.msra.mxu0 %v263
      %502 = vmatprep.subr.mxu0 %v266
      %503 = vmatpush1.msra.mxu0 %v265
      %504 = vmatprep.subr.mxu0 %v268
      %505 = vmatpush1.msra.mxu0 %v267
      %506 = vmatprep.subr.mxu0 %v270
      %507 = vmatpush1.msra.mxu0 %v269
      %508 = vmatprep.subr.mxu0 %v272
      %509 = vmatpush1.msra.mxu0 %v271
      %510 = vmatprep.subr.mxu0 %v274
      %511 = vmatpush1.msra.mxu0 %v273
      %512 = vmatprep.subr.mxu0 %v276
      %513 = vmatpush1.msra.mxu0 %v275
      %514 = vmatprep.subr.mxu0 %v278
      %515 = vmatpush1.msra.mxu0 %v277
      %516 = vmatprep.subr.mxu0 %v280
      %517 = vmatpush1.msra.mxu0 %v279
      %518 = vmatprep.subr.mxu0 %v282
      %519 = vmatpush1.msra.mxu0 %v281
      %520 = vmatprep.subr.mxu0 %v284
      %521 = vmatpush1.msra.mxu0 %v283
      %522 = vmatprep.subr.mxu0 %v286
      %523 = vmatpush1.msra.mxu0 %v285
      %524 = vmatprep.subr.mxu0 %v288
      %525 = vmatpush1.msra.mxu0 %v287
      %526 = vmatprep.subr.mxu0 %v290
      %527 = vmatpush1.msra.mxu0 %v289
      %528 = vmatprep.subr.mxu0 %v292
      %529 = vmatpush1.msra.mxu0 %v291
      %530 = vmatprep.subr.mxu0 %v294
      %531 = vmatpush1.msra.mxu0 %v293
      %532 = vmatprep.subr.mxu0 %v296
      %533 = vmatpush1.msra.mxu0 %v295
      %534 = vmatprep.subr.mxu0 %v298
      %535 = vmatpush1.msra.mxu0 %v297
      %536 = vmatprep.subr.mxu0 %v300
      %537 = vmatpush1.msra.mxu0 %v299
      %538 = vmatprep.subr.mxu0 %v302
      %539 = vmatpush1.msra.mxu0 %v301
      %540 = vmatprep.subr.mxu0 %v304
      %541 = vmatpush1.msra.mxu0 %v303
      %542 = vmatprep.subr.mxu0 %v306
      %543 = vmatpush1.msra.mxu0 %v305
      %544 = vmatprep.subr.mxu0 %v308
      %545 = vmatpush1.msra.mxu0 %v307
      %546 = vmatprep.subr.mxu0 %v310
      %547 = vmatpush1.msra.mxu0 %v309
      %548 = vmatprep.subr.mxu0 %v312
      %549 = vmatpush1.msra.mxu0 %v311
      %550 = vmatprep.mubr.f32.mxu0 %v470
      %551 = vmatmul.mubr.f32.gmra.mrb[0].mxu0 %v462
      %v552 = vpop.f32.mrb[0].mxu0
      %v553 = vadd.f32 %v446, %v552
      %v554 = vpop.f32.mrb[0].mxu0
      %v555 = vadd.f32 %v450, %v554
      %556 = vdwg.mxu0
      %557 = vmatprep.subr.mxu0 %v314
      %558 = vmatpush1.msra.mxu0 %v313
      %559 = vmatprep.subr.mxu0 %v316
      %560 = vmatpush1.msra.mxu0 %v315
      %561 = vmatprep.subr.mxu0 %v318
      %562 = vmatpush1.msra.mxu0 %v317
      %563 = vmatprep.subr.mxu0 %v320
      %564 = vmatpush1.msra.mxu0 %v319
      %565 = vmatprep.subr.mxu0 %v322
      %566 = vmatpush1.msra.mxu0 %v321
      %567 = vmatprep.subr.mxu0 %v324
      %568 = vmatpush1.msra.mxu0 %v323
      %569 = vmatprep.subr.mxu0 %v326
      %570 = vmatpush1.msra.mxu0 %v325
      %571 = vmatprep.subr.mxu0 %v328
      %572 = vmatpush1.msra.mxu0 %v327
      %573 = vmatprep.subr.mxu0 %v330
      %574 = vmatpush1.msra.mxu0 %v329
      %575 = vmatprep.subr.mxu0 %v332
      %576 = vmatpush1.msra.mxu0 %v331
      %577 = vmatprep.subr.mxu0 %v334
      %578 = vmatpush1.msra.mxu0 %v333
      %579 = vmatprep.subr.mxu0 %v336
      %580 = vmatpush1.msra.mxu0 %v335
      %581 = vmatprep.subr.mxu0 %v338
      %582 = vmatpush1.msra.mxu0 %v337
      %583 = vmatprep.subr.mxu0 %v340
      %584 = vmatpush1.msra.mxu0 %v339
      %585 = vmatprep.subr.mxu0 %v342
      %586 = vmatpush1.msra.mxu0 %v341
      %587 = vmatprep.subr.mxu0 %v344
      %588 = vmatpush1.msra.mxu0 %v343
      %589 = vmatprep.subr.mxu0 %v346
      %590 = vmatpush1.msra.mxu0 %v345
      %591 = vmatprep.subr.mxu0 %v348
      %592 = vmatpush1.msra.mxu0 %v347
      %593 = vmatprep.subr.mxu0 %v350
      %594 = vmatpush1.msra.mxu0 %v349
      %595 = vmatprep.subr.mxu0 %v352
      %596 = vmatpush1.msra.mxu0 %v351
      %597 = vmatprep.subr.mxu0 %v354
      %598 = vmatpush1.msra.mxu0 %v353
      %599 = vmatprep.subr.mxu0 %v356
      %600 = vmatpush1.msra.mxu0 %v355
      %601 = vmatprep.subr.mxu0 %v358
      %602 = vmatpush1.msra.mxu0 %v357
      %603 = vmatprep.subr.mxu0 %v360
      %604 = vmatpush1.msra.mxu0 %v359
      %605 = vmatprep.subr.mxu0 %v362
      %606 = vmatpush1.msra.mxu0 %v361
      %607 = vmatprep.subr.mxu0 %v364
      %608 = vmatpush1.msra.mxu0 %v363
      %609 = vmatprep.subr.mxu0 %v366
      %610 = vmatpush1.msra.mxu0 %v365
      %611 = vmatprep.subr.mxu0 %v368
      %612 = vmatpush1.msra.mxu0 %v367
      %613 = vmatprep.subr.mxu0 %v370
      %614 = vmatpush1.msra.mxu0 %v369
      %615 = vmatprep.subr.mxu0 %v372
      %616 = vmatpush1.msra.mxu0 %v371
      %617 = vmatprep.subr.mxu0 %v374
      %618 = vmatpush1.msra.mxu0 %v373
      %619 = vmatprep.subr.mxu0 %v376
      %620 = vmatpush1.msra.mxu0 %v375
      %621 = vmatprep.mubr.f32.mxu0 %v471
      %622 = vmatmul.mubr.f32.gmra.mrb[0].mxu0 %v469
      %v623 = vpop.f32.mrb[0].mxu0
      %v624 = vadd.f32 %v553, %v623
      %v625 = vpop.f32.mrb[0].mxu0
      %v626 = vadd.f32 %v555, %v625
      %627 = vdwg.mxu0
      %628 = vmatprep.subr.mxu0 %v378
      %629 = vmatpush1.msra.mxu0 %v377
      %630 = vmatprep.subr.mxu0 %v380
      %631 = vmatpush1.msra.mxu0 %v379
      %632 = vmatprep.subr.mxu0 %v382
      %633 = vmatpush1.msra.mxu0 %v381
      %634 = vmatprep.subr.mxu0 %v384
      %635 = vmatpush1.msra.mxu0 %v383
      %636 = vmatprep.subr.mxu0 %v386
      %637 = vmatpush1.msra.mxu0 %v385
      %638 = vmatprep.subr.mxu0 %v388
      %639 = vmatpush1.msra.mxu0 %v387
      %640 = vmatprep.subr.mxu0 %v390
      %641 = vmatpush1.msra.mxu0 %v389
      %642 = vmatprep.subr.mxu0 %v392
      %643 = vmatpush1.msra.mxu0 %v391
      %644 = vmatprep.subr.mxu0 %v394
      %645 = vmatpush1.msra.mxu0 %v393
      %646 = vmatprep.subr.mxu0 %v396
      %647 = vmatpush1.msra.mxu0 %v395
      %648 = vmatprep.subr.mxu0 %v398
      %649 = vmatpush1.msra.mxu0 %v397
      %650 = vmatprep.subr.mxu0 %v400
      %651 = vmatpush1.msra.mxu0 %v399
      %652 = vmatprep.subr.mxu0 %v402
      %653 = vmatpush1.msra.mxu0 %v401
      %654 = vmatprep.subr.mxu0 %v404
      %655 = vmatpush1.msra.mxu0 %v403
      %656 = vmatprep.subr.mxu0 %v406
      %657 = vmatpush1.msra.mxu0 %v405
      %658 = vmatprep.subr.mxu0 %v408
      %659 = vmatpush1.msra.mxu0 %v407
      %660 = vmatprep.subr.mxu0 %v410
      %661 = vmatpush1.msra.mxu0 %v409
      %662 = vmatprep.subr.mxu0 %v412
      %663 = vmatpush1.msra.mxu0 %v411
      %664 = vmatprep.subr.mxu0 %v414
      %665 = vmatpush1.msra.mxu0 %v413
      %666 = vmatprep.subr.mxu0 %v416
      %667 = vmatpush1.msra.mxu0 %v415
      %668 = vmatprep.subr.mxu0 %v418
      %669 = vmatpush1.msra.mxu0 %v417
      %670 = vmatprep.subr.mxu0 %v420
      %671 = vmatpush1.msra.mxu0 %v419
      %672 = vmatprep.subr.mxu0 %v422
      %673 = vmatpush1.msra.mxu0 %v421
      %674 = vmatprep.subr.mxu0 %v424
      %675 = vmatpush1.msra.mxu0 %v423
      %676 = vmatprep.subr.mxu0 %v426
      %677 = vmatpush1.msra.mxu0 %v425
      %678 = vmatprep.subr.mxu0 %v428
      %679 = vmatpush1.msra.mxu0 %v427
      %680 = vmatprep.subr.mxu0 %v430
      %681 = vmatpush1.msra.mxu0 %v429
      %682 = vmatprep.subr.mxu0 %v432
      %683 = vmatpush1.msra.mxu0 %v431
      %684 = vmatprep.subr.mxu0 %v434
      %685 = vmatpush1.msra.mxu0 %v433
      %686 = vmatprep.subr.mxu0 %v436
      %687 = vmatpush1.msra.mxu0 %v435
      %688 = vmatprep.subr.mxu0 %v438
      %689 = vmatpush1.msra.mxu0 %v437
      %690 = vmatprep.subr.mxu0 %v440
      %691 = vmatpush1.msra.mxu0 %v439
      %692 = vmatprep.mubr.f32.mxu0 %v479
      %693 = vmatmul.mubr.f32.gmra.mrb[0].mxu0 %v478
      %v694 = vpop.f32.mrb[0].mxu0
      %v695 = vadd.f32 %v624, %v694
      %v696 = vpop.f32.mrb[0].mxu0
      %v697 = vadd.f32 %v626, %v696
      %698 = vdwg.mxu0
      %v699 = vmax.f32 %v695, 0.0
      %v700 = vmax.f32 %v697, 0.0
      %v701 = vld [vmem:[#allocation8] sm:$0xff]
      %v702 = vld [vmem:[#allocation8 + $0x8] sm:$0xff]
      %v703 = vld [vmem:[#allocation8 + $0x10] sm:$0xff]
      %v704 = vld [vmem:[#allocation8 + $0x18] sm:$0xff]
      %v705 = vld [vmem:[#allocation8 + $0x20] sm:$0xff]
      %v706 = vld [vmem:[#allocation8 + $0x28] sm:$0xff]
      %v707 = vld [vmem:[#allocation8 + $0x30] sm:$0xff]
      %v708 = vld [vmem:[#allocation8 + $0x38] sm:$0xff]
      %v709 = vld [vmem:[#allocation8 + $0x40] sm:$0xff]
      %v710 = vld [vmem:[#allocation8 + $0x48] sm:$0xff]
      %v711 = vld [vmem:[#allocation8 + $0x50] sm:$0xff]
      %v712 = vld [vmem:[#allocation8 + $0x58] sm:$0xff]
      %v713 = vld [vmem:[#allocation8 + $0x60] sm:$0xff]
      %v714 = vld [vmem:[#allocation8 + $0x68] sm:$0xff]
      %v715 = vld [vmem:[#allocation8 + $0x70] sm:$0xff]
      %v716 = vld [vmem:[#allocation8 + $0x78] sm:$0xff]
      %v717 = vld [vmem:[#allocation8 + $0x80] sm:$0xff]
      %v718 = vld [vmem:[#allocation8 + $0x88] sm:$0xff]
      %v719 = vld [vmem:[#allocation8 + $0x90] sm:$0xff]
      %v720 = vld [vmem:[#allocation8 + $0x98] sm:$0xff]
      %v721 = vld [vmem:[#allocation8 + $0xa0] sm:$0xff]
      %v722 = vld [vmem:[#allocation8 + $0xa8] sm:$0xff]
      %v723 = vld [vmem:[#allocation8 + $0xb0] sm:$0xff]
      %v724 = vld [vmem:[#allocation8 + $0xb8] sm:$0xff]
      %v725 = vld [vmem:[#allocation8 + $0xc0] sm:$0xff]
      %v726 = vld [vmem:[#allocation8 + $0xc8] sm:$0xff]
      %v727 = vld [vmem:[#allocation8 + $0xd0] sm:$0xff]
      %v728 = vld [vmem:[#allocation8 + $0xd8] sm:$0xff]
      %v729 = vld [vmem:[#allocation8 + $0xe0] sm:$0xff]
      %v730 = vld [vmem:[#allocation8 + $0xe8] sm:$0xff]
      %v731 = vld [vmem:[#allocation8 + $0xf0] sm:$0xff]
      %v732 = vld [vmem:[#allocation8 + $0xf8] sm:$0xff]
      %v733 = vld [vmem:[%s4] sm:$0x1]
      %v735 = vlaneseq
      %v736 = vshrl.u32 %v735, 7
      %v737 = vsub.s32 0, %v736
      %v738 = vrot.slane %v733, %v737
      %740 = vmatprep.subr.mxu0 0.0
      %741 = vmatpush1.msra.mxu0 %v701
      %742 = vmatprep.subr.mxu0 0.0
      %743 = vmatpush1.msra.mxu0 %v702
      %744 = vmatprep.subr.mxu0 0.0
      %745 = vmatpush1.msra.mxu0 %v703
      %746 = vmatprep.subr.mxu0 0.0
      %747 = vmatpush1.msra.mxu0 %v704
      %748 = vmatprep.subr.mxu0 0.0
      %749 = vmatpush1.msra.mxu0 %v705
      %750 = vmatprep.subr.mxu0 0.0
      %751 = vmatpush1.msra.mxu0 %v706
      %752 = vmatprep.subr.mxu0 0.0
      %753 = vmatpush1.msra.mxu0 %v707
      %754 = vmatprep.subr.mxu0 0.0
      %755 = vmatpush1.msra.mxu0 %v708
      %756 = vmatprep.subr.mxu0 0.0
      %757 = vmatpush1.msra.mxu0 %v709
      %758 = vmatprep.subr.mxu0 0.0
      %759 = vmatpush1.msra.mxu0 %v710
      %760 = vmatprep.subr.mxu0 0.0
      %761 = vmatpush1.msra.mxu0 %v711
      %762 = vmatprep.subr.mxu0 0.0
      %763 = vmatpush1.msra.mxu0 %v712
      %764 = vmatprep.subr.mxu0 0.0
      %765 = vmatpush1.msra.mxu0 %v713
      %766 = vmatprep.subr.mxu0 0.0
      %767 = vmatpush1.msra.mxu0 %v714
      %768 = vmatprep.subr.mxu0 0.0
      %769 = vmatpush1.msra.mxu0 %v715
      %770 = vmatprep.subr.mxu0 0.0
      %771 = vmatpush1.msra.mxu0 %v716
      %772 = vmatprep.subr.mxu0 0.0
      %773 = vmatpush1.msra.mxu0 %v717
      %774 = vmatprep.subr.mxu0 0.0
      %775 = vmatpush1.msra.mxu0 %v718
      %776 = vmatprep.subr.mxu0 0.0
      %777 = vmatpush1.msra.mxu0 %v719
      %778 = vmatprep.subr.mxu0 0.0
      %779 = vmatpush1.msra.mxu0 %v720
      %780 = vmatprep.subr.mxu0 0.0
      %781 = vmatpush1.msra.mxu0 %v721
      %782 = vmatprep.subr.mxu0 0.0
      %783 = vmatpush1.msra.mxu0 %v722
      %784 = vmatprep.subr.mxu0 0.0
      %785 = vmatpush1.msra.mxu0 %v723
      %786 = vmatprep.subr.mxu0 0.0
      %787 = vmatpush1.msra.mxu0 %v724
      %788 = vmatprep.subr.mxu0 0.0
      %789 = vmatpush1.msra.mxu0 %v725
      %790 = vmatprep.subr.mxu0 0.0
      %791 = vmatpush1.msra.mxu0 %v726
      %792 = vmatprep.subr.mxu0 0.0
      %793 = vmatpush1.msra.mxu0 %v727
      %794 = vmatprep.subr.mxu0 0.0
      %795 = vmatpush1.msra.mxu0 %v728
      %796 = vmatprep.subr.mxu0 0.0
      %797 = vmatpush1.msra.mxu0 %v729
      %798 = vmatprep.subr.mxu0 0.0
      %799 = vmatpush1.msra.mxu0 %v730
      %800 = vmatprep.subr.mxu0 0.0
      %801 = vmatpush1.msra.mxu0 %v731
      %802 = vmatprep.subr.mxu0 0.0
      %803 = vmatpush1.msra.mxu0 %v732
      %804 = vmatprep.mubr.f32.mxu0 %v700
      %805 = vmatmul.mubr.f32.gmra.mrb[0].mxu0 %v699
      %v806 = vpop.f32.mrb[0].mxu0
      %v807 = vadd.f32 %v738, %v806
      %v808 = vpop.f32.mrb[0].mxu0
      %809 = vdwg.mxu0
      %v810 = vxor.u32 %v807, 2147483648
      %v811 = vmul.f32 %v810, 1.442695
      %v812 = vpow.pop %v811
      %v813 = vadd.f32 %v812, 1.0
      %v814 = vrcp.pop %v813
      %v815 = vmul.f32 1.0, %v814
      %816 = vst [vmem:[#allocation9] sm:$0x3] %v815
    $region41: #{tpu_custom_call.1} parent=1 // pred_fallthru
      _
    // Predicated region
    $region42: #{tpu_custom_call.1} parent=1 // pred_check
      _
    $region43: #{tpu_custom_call.1} parent=1 // pred_check_branch
      %818 = sbr.rel (0) target = $region45
    $region44: #{tpu_custom_call.1} parent=1 // pred_region
      %s820 = ssub.s32 32, 32
      %821 = vsyncadd [#allocation5], %s820
      %s823 = sshll.u32 [#allocation9], 4
      %s824 = int_to_ptr.vmem [resolvable:$true] %s823
      %826 = dma.vmem_to_hbm [thread:$0]  %s824, 32, %s5, [#allocation5]
    $region45: #{tpu_custom_call.1} parent=1 // pred_fallthru
      _
    // Predicated region
    $region46: #{tpu_custom_call.1} parent=1 // pred_check
      _
    $region47: #{tpu_custom_call.1} parent=1 // pred_check_branch
      %828 = sbr.rel (0) target = $region49
    $region48: #{tpu_custom_call.1} parent=1 // pred_region
      %829 = dma.done [#allocation5], 32
    $region49: #{tpu_custom_call.1} parent=1 // pred_fallthru
      _
    %830 = vsyncpa [#allocation4], 1
    %831 = vsyncpa [#allocation7], 1
    %832 = vsyncpa [#allocation5], 1

</llo_original>
